<compile_context>
chip_gen: v7x
topology: tpu7x:2x2x1
jax: 0.10.0
libtpu: 0.0.40
codegen_flags: <defaults>
</compile_context>

<pallas_src>
from typing import NamedTuple

import jax
import jax.numpy as jnp
from jax.experimental import pallas as pl
from jax.experimental.pallas import tpu as pltpu


def _round_up(x, m):
    return ((x + m - 1) // m) * m


def _sublane_multiple(dtype):
    # f32 -> 8, bf16 -> 16, int8/fp8 -> 32 (packed sublanes).
    return max(8, 32 // jnp.dtype(dtype).itemsize)


def _plan_kn(K, N, tn, tk):
    """Tile / padded-shape plan for the (K, N) weight."""
    Kp = _round_up(K, 128)
    Np = _round_up(N, 128)
    tk = min(tk, Kp)
    tn = min(tn, Np)
    Kp = _round_up(Kp, tk)
    Np = _round_up(Np, tn)
    # Keep >= 2 N blocks when possible: with a single M block the "parallel"
    # N axis is the only cross-TensorCore parallelism on v7x.
    if Np // tn < 2 and Np >= 256:
        tn = max(128, (Np // 2 // 128) * 128)
        Np = _round_up(_round_up(N, 128), tn)
    return Kp, Np, tk, tn


class PerceiverVLADParams(NamedTuple):
    w_kn: jax.Array     # (Kp, Np): transposed + zero-padded weight, MXU-canonical
    b_row: jax.Array    # (1, Np): f32 bias row
    n_out: int          # true out_dim
    k_in: int           # true num_latents * in_dim
    tn: int
    tk: int


def prepare_perceiver_vlad(weight, bias, *, tn=512, tk=1024, param_dtype=None):
    """One-time parameter layout prep — call OUTSIDE the per-step hot path.

    nn.Linear stores weight as (out_dim, K); transpose to the canonical
    (K, out_dim) MXU layout (out_dim on the lane axis) and zero-pad K
    (required for the reduction) and N (sliced off after the kernel) to
    tile-divisible sizes.  Optionally cast parameters to bf16 to halve the
    HBM-bound weight stream.
    """
    N, K = weight.shape
    assert bias.shape == (N,), (bias.shape, N)
    Kp, Np, tk, tn = _plan_kn(K, N, tn, tk)
    w = weight.T                               # (K, N)
    if param_dtype is not None:
        w = w.astype(param_dtype)
    w = jnp.pad(w, ((0, Kp - K), (0, Np - N)))
    b = jnp.pad(bias.astype(jnp.float32).reshape(1, N), ((0, 0), (0, Np - N)))
    return PerceiverVLADParams(w, b, N, K, tn, tn if False else tk)._replace(tn=tn, tk=tk)


def _pvlad_kernel(x_ref, w_ref, b_ref, o_ref, acc_ref):
    k = pl.program_id(2)

    @pl.when(k == 0)
    def _init():
        acc_ref[...] = jnp.zeros_like(acc_ref)

    # (tm, tk) @ (tk, tn): canonical MXU operand order (N on the lane axis),
    # no transpose / XLU work inside the kernel.
    acc_ref[...] += jnp.dot(x_ref[...], w_ref[...],
                            preferred_element_type=jnp.float32)

    @pl.when(k == pl.num_programs(2) - 1)
    def _finalize():
        o_ref[...] = (acc_ref[...] + b_ref[...]).astype(o_ref.dtype)


def perceiver_vlad(x, params: PerceiverVLADParams):
    """PerceiverVLAD forward: reshape(..., K) then Linear, via a tiled MXU matmul.

    x: (..., num_latents, in_dim);  returns (..., out_dim) in x.dtype.
    """
    lead = x.shape[:-2]
    K = x.shape[-2] * x.shape[-1]
    assert K == params.k_in, (K, params.k_in)
    Kp, Np = params.w_kn.shape
    tn, tk = params.tn, params.tk
    N = params.n_out
    wdtype = params.w_kn.dtype
    out_dtype = x.dtype

    x2 = x.reshape((-1, K)).astype(wdtype)     # free layout-only reshape
    M = x2.shape[0]

    # Single M block: the (Kp, Np) weight is streamed from HBM exactly once.
    tm = _round_up(max(M, 1), _sublane_multiple(wdtype))
    Mp = tm
    if (Mp, Kp) != (M, K):
        # x is tiny (M x K); zero-padding K is required for the reduction.
        x2 = jnp.pad(x2, ((0, Mp - M), (0, Kp - K)))

    k_steps = Kp // tk
    n_steps = Np // tn
    grid = (1, n_steps, k_steps)

    itemsize = jnp.dtype(wdtype).itemsize
    out_isz = jnp.dtype(out_dtype).itemsize

    # Deeper buffering on the weight stream hides DMA issue latency when the
    # per-step compute is short (tiny tm => few vmatmuls per step).
    w_bufs = 3 if (n_steps * k_steps) >= 3 else 2
    if w_bufs > 2:
        try:
            w_spec = pl.BlockSpec((tk, tn), lambda i, j, k: (k, j),
                                  pipeline_mode=pl.Buffered(w_bufs))
        except TypeError:  # older BlockSpec signature
            w_bufs = 2
            w_spec = pl.BlockSpec((tk, tn), lambda i, j, k: (k, j))
    else:
        w_spec = pl.BlockSpec((tk, tn), lambda i, j, k: (k, j))

    vmem_needed = (2 * tm * tk * itemsize          # x (double-buffered)
                   + w_bufs * tk * tn * itemsize   # weight stream
                   + 2 * tn * 4                    # bias row
                   + 2 * tm * tn * out_isz         # output
                   + tm * tn * 4)                  # f32 accumulator
    # Floor 16 MiB (v5e's small scoped default), cap 48 MiB (v7x has 64 MiB).
    vmem_limit = int(min(max(2 * vmem_needed + (2 << 20), 16 << 20), 48 << 20))

    cost = pl.CostEstimate(
        flops=2 * M * N * K,
        transcendentals=0,
        bytes_accessed=(M * K + K * N) * itemsize + M * N * out_isz,
    )

    out = pl.pallas_call(
        _pvlad_kernel,
        out_shape=jax.ShapeDtypeStruct((Mp, Np), out_dtype),
        grid_spec=pltpu.PrefetchScalarGridSpec(
            num_scalar_prefetch=0,
            grid=grid,
            in_specs=[
                pl.BlockSpec((tm, tk), lambda i, j, k: (0, k)),   # x2 (all of M)
                w_spec,                                           # weight (K, N)
                pl.BlockSpec((1, tn), lambda i, j, k: (0, j)),    # bias row
            ],
            out_specs=pl.BlockSpec((tm, tn), lambda i, j, k: (0, j)),
            scratch_shapes=[pltpu.VMEM((tm, tn), jnp.float32)],
        ),
        compiler_params=pltpu.CompilerParams(
            # M/N tiles are independent (shardable across v7x's 2 TensorCores);
            # K is the in-kernel reduction axis.
            dimension_semantics=("parallel", "parallel", "arbitrary"),
            vmem_limit_bytes=vmem_limit,
        ),
        cost_estimate=cost,
    )(x2, params.w_kn, params.b_row)

    return out[:M, :N].reshape(lead + (N,))


def perceiver_vlad_unprepared(x, weight, bias, *, tn=512, tk=1024, param_dtype=None):
    """Convenience wrapper matching the PyTorch signature.

    In real use hoist prepare_perceiver_vlad() out of the hot loop (parameters
    are static) so the weight transpose/pad is not paid per call.
    """
    params = prepare_perceiver_vlad(weight, bias, tn=tn, tk=tk, param_dtype=param_dtype)
    return perceiver_vlad(x, params)


def _reference(x, weight, bias):
    x2 = x.reshape(x.shape[:-2] + (x.shape[-2] * x.shape[-1],))
    return jnp.dot(x2, weight.T, precision=jax.lax.Precision.HIGHEST) + bias


if __name__ == "__main__":
    key = jax.random.PRNGKey(0)
    kx, kw, kb, kx2, kw2, kb2 = jax.random.split(key, 6)

    # --- Case 1: small shapes (f32), module's toy config. ------------------
    batch, num_latents, in_dim, out_dim = 2, 8, 32, 32
    x = jax.random.normal(kx, (batch, num_latents, in_dim), dtype=jnp.float32)
    weight = 0.05 * jax.random.normal(
        kw, (out_dim, num_latents * in_dim), dtype=jnp.float32)
    bias = jax.random.normal(kb, (out_dim,), dtype=jnp.float32)

    params = prepare_perceiver_vlad(weight, bias)        # one-time prep
    out = perceiver_vlad(x, params)
    jax.block_until_ready(out)
    ref = _reference(x, weight, bias)
    assert out.shape == (batch, out_dim)
    assert jnp.allclose(out, ref, atol=1e-4, rtol=1e-4), float(
        jnp.max(jnp.abs(out - ref)))

    # --- Case 2: larger f32 case — multi-step K grid, 2 N blocks, Buffered(3).
    b2, nl2, id2, od2 = 4, 64, 64, 512
    x_l = jax.random.normal(kx2, (b2, nl2, id2), dtype=jnp.float32)
    w_l = 0.02 * jax.random.normal(kw2, (od2, nl2 * id2), dtype=jnp.float32)
    b_l = jax.random.normal(kb2, (od2,), dtype=jnp.float32)

    params_l = prepare_perceiver_vlad(w_l, b_l)
    out_l = perceiver_vlad(x_l, params_l)
    jax.block_until_ready(out_l)
    ref_l = _reference(x_l, w_l, b_l)
    assert out_l.shape == (b2, od2)
    assert jnp.allclose(out_l, ref_l, atol=1e-3, rtol=1e-3), float(
        jnp.max(jnp.abs(out_l - ref_l)))

    # --- Case 3: bf16 parameters (halved weight bytes), f32 accumulation. ---
    params_bf16 = prepare_perceiver_vlad(w_l, b_l, param_dtype=jnp.bfloat16)
    out_bf16 = perceiver_vlad(x_l, params_bf16)
    jax.block_until_ready(out_bf16)
    ref_bf16 = jnp.dot(
        x_l.reshape(b2, -1).astype(jnp.bfloat16).astype(jnp.float32),
        w_l.astype(jnp.bfloat16).astype(jnp.float32).T,
        precision=jax.lax.Precision.HIGHEST) + b_l
    assert out_bf16.shape == (b2, od2)
    assert jnp.allclose(out_bf16.astype(jnp.float32), ref_bf16,
                        atol=5e-2, rtol=5e-2), float(
        jnp.max(jnp.abs(out_bf16.astype(jnp.float32) - ref_bf16)))

    print("KERNEL_OK")
</pallas_src>

<mosaic_0001>
module attributes {stable_mosaic.version = 11 : i64} {
  func.func @_pvlad_kernel(%arg0: i32, %arg1: i32, %arg2: i32, %arg3: memref<8x256xf32, #tpu.memory_space<vmem>>, %arg4: memref<256x128xf32, #tpu.memory_space<vmem>>, %arg5: memref<1x128xf32, #tpu.memory_space<vmem>>, %arg6: memref<8x128xf32, #tpu.memory_space<vmem>>, %arg7: memref<8x128xf32, #tpu.memory_space<vmem>>) attributes {dimension_semantics = [#tpu.dimension_semantics<parallel>, #tpu.dimension_semantics<parallel>, #tpu.dimension_semantics<arbitrary>], iteration_bounds = array<i64: 1, 1, 1>, scalar_prefetch = 0 : i64, scratch_operands = 1 : i64, tpu.core_type = #tpu.core_type<tc>, window_params = [{transform_indices = @transform_0, window_bounds = array<i64: 8, 256>}, {transform_indices = @transform_1, window_bounds = array<i64: 256, 128>}, {transform_indices = @transform_2, window_bounds = array<i64: 1, 128>}, {transform_indices = @transform_3, window_bounds = array<i64: 8, 128>}]} {
    %c0_i32 = arith.constant 0 : i32
    %0 = arith.cmpi eq, %arg2, %c0_i32 : i32
    %1 = arith.extui %0 : i1 to i32
    %c0_i32_0 = arith.constant 0 : i32
    %2 = arith.cmpi ne, %1, %c0_i32_0 : i32
    scf.if %2 {
      %cst_10 = arith.constant 0.000000e+00 : f32
      %12 = vector.broadcast %cst_10 : f32 to vector<8x128xf32>
      %c0_11 = arith.constant 0 : index
      %c0_12 = arith.constant 0 : index
      %13 = vector.load %arg7[%c0_11, %c0_12] : memref<8x128xf32, #tpu.memory_space<vmem>>, vector<8x128xf32>
      tpu.vector_store %arg7[%c0_11, %c0_12], %12 {strides = array<i32>} : memref<8x128xf32, #tpu.memory_space<vmem>>, vector<8x128xf32>,
    } else {
    }
    %c0 = arith.constant 0 : index
    %c0_1 = arith.constant 0 : index
    %3 = vector.load %arg7[%c0, %c0_1] : memref<8x128xf32, #tpu.memory_space<vmem>>, vector<8x128xf32>
    %c0_2 = arith.constant 0 : index
    %c0_3 = arith.constant 0 : index
    %4 = vector.load %arg3[%c0_2, %c0_3] : memref<8x256xf32, #tpu.memory_space<vmem>>, vector<8x256xf32>
    %c0_4 = arith.constant 0 : index
    %c0_5 = arith.constant 0 : index
    %5 = vector.load %arg4[%c0_4, %c0_5] : memref<256x128xf32, #tpu.memory_space<vmem>>, vector<256x128xf32>
    %cst = arith.constant dense<0.000000e+00> : vector<8x128xf32>
    %6 = tpu.matmul %4, %5, %cst {dimension_numbers = #tpu.dot_dimension_numbers<[1], [0], [0], [1], [0, 0, 1, 1], [], []>} : vector<8x256xf32>, vector<256x128xf32>, vector<8x128xf32> -> vector<8x128xf32>
    %7 = arith.addf %3, %6 : vector<8x128xf32>
    %c0_6 = arith.constant 0 : index
    %c0_7 = arith.constant 0 : index
    %8 = vector.load %arg7[%c0_6, %c0_7] : memref<8x128xf32, #tpu.memory_space<vmem>>, vector<8x128xf32>
    tpu.vector_store %arg7[%c0_6, %c0_7], %7 {strides = array<i32>} : memref<8x128xf32, #tpu.memory_space<vmem>>, vector<8x128xf32>,
    %c0_i32_8 = arith.constant 0 : i32
    %9 = arith.cmpi eq, %arg2, %c0_i32_8 : i32
    %10 = arith.extui %9 : i1 to i32
    %c0_i32_9 = arith.constant 0 : i32
    %11 = arith.cmpi ne, %10, %c0_i32_9 : i32
    scf.if %11 {
      %c0_10 = arith.constant 0 : index
      %c0_11 = arith.constant 0 : index
      %12 = vector.load %arg7[%c0_10, %c0_11] : memref<8x128xf32, #tpu.memory_space<vmem>>, vector<8x128xf32>
      %c0_12 = arith.constant 0 : index
      %c0_13 = arith.constant 0 : index
      %13 = vector.load %arg5[%c0_12, %c0_13] : memref<1x128xf32, #tpu.memory_space<vmem>>, vector<1x128xf32>
      %14 = vector.broadcast %13 : vector<1x128xf32> to vector<8x128xf32>
      %15 = arith.addf %12, %14 : vector<8x128xf32>
      %c0_14 = arith.constant 0 : index
      %c0_15 = arith.constant 0 : index
      %16 = vector.load %arg6[%c0_14, %c0_15] : memref<8x128xf32, #tpu.memory_space<vmem>>, vector<8x128xf32>
      tpu.vector_store %arg6[%c0_14, %c0_15], %15 {strides = array<i32>} : memref<8x128xf32, #tpu.memory_space<vmem>>, vector<8x128xf32>,
    } else {
    }
    return
  }
  func.func @transform_0(%arg0: i32, %arg1: i32, %arg2: i32) -> (i32, i32) {
    %c0_i32 = arith.constant 0 : i32
    %c0_i32_0 = arith.constant 0 : i32
    return %c0_i32, %arg2 : i32, i32
  }
  func.func @transform_1(%arg0: i32, %arg1: i32, %arg2: i32) -> (i32, i32) {
    %c0_i32 = arith.constant 0 : i32
    return %arg2, %arg1 : i32, i32
  }
  func.func @transform_2(%arg0: i32, %arg1: i32, %arg2: i32) -> (i32, i32) {
    %c0_i32 = arith.constant 0 : i32
    %c0_i32_0 = arith.constant 0 : i32
    return %c0_i32, %arg1 : i32, i32
  }
  func.func @transform_3(%arg0: i32, %arg1: i32, %arg2: i32) -> (i32, i32) {
    %c0_i32 = arith.constant 0 : i32
    %c0_i32_0 = arith.constant 0 : i32
    return %c0_i32, %arg1 : i32, i32
  }
}

</mosaic_0001>

<llo_original>
// kernel: tpu_custom_call.1
$region0: #{tpu_custom_call.1}
  #allocation0 [shape = 'u32[]', space=smem, size = 0x4, offset = 0x4, fixed_abs, tag = 'smem constant byte address 0x4 - core index']
  #allocation1 [shape = 'u32[144,128]{1,0:T(1,128)}', space=vmem, size = 0x12000, scoped, tag = 'internal scratch']
  #allocation2 [shape = 'f32[8,128]{1,0:T(8,128)}', space=vmem, size = 0x1000, scoped, tag = 'scratch operand']
  %s0 = inlined_call_operand.hbm [shape: f32[8,256], index: 0, kind: input, shape index: {}]
  %s1 = inlined_call_operand.hbm [shape: f32[256,128], index: 1, kind: input, shape index: {}]
  %s2 = inlined_call_operand.vmem [shape: f32[1,128], index: 2, kind: input, shape index: {}]
  %s3 = inlined_call_operand.hbm [shape: f32[8,128], index: 3, kind: output, shape index: {}]
  %s4 = sld [smem:[#allocation0]]
  $region38: #{tpu_custom_call.1} parent=0
    _
  %s6 = ssub.s32 1, %s4
  %s7 = scalar_select 0, %s6, %s4
  $region1: #{tpu_custom_call.1} parent=0
    #allocation3 [shape = 'u8[8192]{0}', space=vmem, size = 0x2000, scoped, tag = 'input window, operand 0, single buffered']
    #allocation4 [shape = 's32[1]{0}', space=sflag, size = 0x4, scoped, tag = 'scoped memory for tpu_custom_call.1']
    #allocation5 [shape = 's32[1]{0}', space=sflag, size = 0x4, scoped, tag = 'scoped memory for tpu_custom_call.1']
    #allocation6 [shape = 'u8[131072]{0}', space=vmem, size = 0x20000, scoped, tag = 'input window, operand 1, single buffered']
    #allocation7 [shape = 's32[1]{0}', space=sflag, size = 0x4, scoped, tag = 'scoped memory for tpu_custom_call.1']
    #allocation8 [shape = 'u8[4096]{0}', space=vmem, size = 0x1000, scoped, tag = 'output window, operand 0, single buffered']
    %8 = vsyncpa [#allocation4], 0
    %9 = vsyncpa [#allocation7], 0
    %10 = vsyncpa [#allocation5], 0
    // Predicated region
    $region2: #{tpu_custom_call.1} parent=1 // pred_check
      _
    $region3: #{tpu_custom_call.1} parent=1 // pred_check_branch
      %12 = sbr.rel (0) target = $region5
    $region4: #{tpu_custom_call.1} parent=1 // pred_region
      %s14 = ssub.s32 256, 256
      %15 = vsyncadd [#allocation4], %s14
      %s17 = sshll.u32 [#allocation3], 4
      %s18 = int_to_ptr.vmem [resolvable:$true] %s17
      %20 = dma.hbm_to_vmem [thread:$0]  %s0, 256, %s18, [#allocation4]
    $region5: #{tpu_custom_call.1} parent=1 // pred_fallthru
      _
    // Predicated region
    $region6: #{tpu_custom_call.1} parent=1 // pred_check
      _
    $region7: #{tpu_custom_call.1} parent=1 // pred_check_branch
      %22 = sbr.rel (0) target = $region9
    $region8: #{tpu_custom_call.1} parent=1 // pred_region
      %s24 = ssub.s32 4096, 4096
      %25 = vsyncadd [#allocation7], %s24
      %s26 = sshll.u32 [#allocation6], 4
      %s27 = int_to_ptr.vmem [resolvable:$true] %s26
      %32 = dma.hbm_to_vmem [thread:$0]  %s1, 4096, %s27, [#allocation7], 128, 128, 8
    $region9: #{tpu_custom_call.1} parent=1 // pred_fallthru
      _
    // Predicated region
    $region10: #{tpu_custom_call.1} parent=1 // pred_check
      _
    $region11: #{tpu_custom_call.1} parent=1 // pred_check_branch
      %34 = sbr.rel (0) target = $region13
    $region12: #{tpu_custom_call.1} parent=1 // pred_region
      _
    $region13: #{tpu_custom_call.1} parent=1 // pred_fallthru
      _
    // Predicated region
    $region14: #{tpu_custom_call.1} parent=1 // pred_check
      _
    $region15: #{tpu_custom_call.1} parent=1 // pred_check_branch
      %36 = sbr.rel (0) target = $region17
    $region16: #{tpu_custom_call.1} parent=1 // pred_region
      %37 = dma.done [#allocation4], 256
    $region17: #{tpu_custom_call.1} parent=1 // pred_fallthru
      _
    // Predicated region
    $region18: #{tpu_custom_call.1} parent=1 // pred_check
      _
    $region19: #{tpu_custom_call.1} parent=1 // pred_check_branch
      %39 = sbr.rel (0) target = $region21
    $region20: #{tpu_custom_call.1} parent=1 // pred_region
      %40 = dma.done [#allocation7], 4096
    $region21: #{tpu_custom_call.1} parent=1 // pred_fallthru
      _
    %p41 = scmp.eq.s32.totalorder 0, 0
    // Predicated region
    $region22: #{tpu_custom_call.1} parent=1 // pred_check
      %p42 = pneg %p41
    $region23: #{tpu_custom_call.1} parent=1 // pred_check_branch
      %44 = sbr.rel (%p42) target = $region25
    $region24: #{tpu_custom_call.1} parent=1 // pred_region
      %45 = vst [vmem:[#allocation2] sm:$0xff] 0.0
    $region25: #{tpu_custom_call.1} parent=1 // pred_fallthru
      _
    %v46 = vld [vmem:[#allocation2] sm:$0xff]
    %v47 = vld [vmem:[#allocation3] sm:$0xff]
    %v48 = vld [vmem:[#allocation3 + $0x8] sm:$0xff]
    %v49 = vld [vmem:[#allocation6] sm:$0xff]
    %v50 = vld [vmem:[#allocation6 + $0x8] sm:$0xff]
    %v51 = vld [vmem:[#allocation6 + $0x10] sm:$0xff]
    %v52 = vld [vmem:[#allocation6 + $0x18] sm:$0xff]
    %v53 = vld [vmem:[#allocation6 + $0x20] sm:$0xff]
    %v54 = vld [vmem:[#allocation6 + $0x28] sm:$0xff]
    %v55 = vld [vmem:[#allocation6 + $0x30] sm:$0xff]
    %v56 = vld [vmem:[#allocation6 + $0x38] sm:$0xff]
    %v57 = vld [vmem:[#allocation6 + $0x40] sm:$0xff]
    %v58 = vld [vmem:[#allocation6 + $0x48] sm:$0xff]
    %v59 = vld [vmem:[#allocation6 + $0x50] sm:$0xff]
    %v60 = vld [vmem:[#allocation6 + $0x58] sm:$0xff]
    %v61 = vld [vmem:[#allocation6 + $0x60] sm:$0xff]
    %v62 = vld [vmem:[#allocation6 + $0x68] sm:$0xff]
    %v63 = vld [vmem:[#allocation6 + $0x70] sm:$0xff]
    %v64 = vld [vmem:[#allocation6 + $0x78] sm:$0xff]
    %v65 = vld [vmem:[#allocation6 + $0x80] sm:$0xff]
    %v66 = vld [vmem:[#allocation6 + $0x88] sm:$0xff]
    %v67 = vld [vmem:[#allocation6 + $0x90] sm:$0xff]
    %v68 = vld [vmem:[#allocation6 + $0x98] sm:$0xff]
    %v69 = vld [vmem:[#allocation6 + $0xa0] sm:$0xff]
    %v70 = vld [vmem:[#allocation6 + $0xa8] sm:$0xff]
    %v71 = vld [vmem:[#allocation6 + $0xb0] sm:$0xff]
    %v72 = vld [vmem:[#allocation6 + $0xb8] sm:$0xff]
    %v73 = vld [vmem:[#allocation6 + $0xc0] sm:$0xff]
    %v74 = vld [vmem:[#allocation6 + $0xc8] sm:$0xff]
    %v75 = vld [vmem:[#allocation6 + $0xd0] sm:$0xff]
    %v76 = vld [vmem:[#allocation6 + $0xd8] sm:$0xff]
    %v77 = vld [vmem:[#allocation6 + $0xe0] sm:$0xff]
    %v78 = vld [vmem:[#allocation6 + $0xe8] sm:$0xff]
    %v79 = vld [vmem:[#allocation6 + $0xf0] sm:$0xff]
    %v80 = vld [vmem:[#allocation6 + $0xf8] sm:$0xff]
    %81 = vmatprep.subr.mxu0 0.0
    %82 = vmatpush1.msra.mxu0 %v49
    %83 = vmatprep.subr.mxu0 0.0
    %84 = vmatpush1.msra.mxu0 %v50
    %85 = vmatprep.subr.mxu0 0.0
    %86 = vmatpush1.msra.mxu0 %v51
    %87 = vmatprep.subr.mxu0 0.0
    %88 = vmatpush1.msra.mxu0 %v52
    %89 = vmatprep.subr.mxu0 0.0
    %90 = vmatpush1.msra.mxu0 %v53
    %91 = vmatprep.subr.mxu0 0.0
    %92 = vmatpush1.msra.mxu0 %v54
    %93 = vmatprep.subr.mxu0 0.0
    %94 = vmatpush1.msra.mxu0 %v55
    %95 = vmatprep.subr.mxu0 0.0
    %96 = vmatpush1.msra.mxu0 %v56
    %97 = vmatprep.subr.mxu0 0.0
    %98 = vmatpush1.msra.mxu0 %v57
    %99 = vmatprep.subr.mxu0 0.0
    %100 = vmatpush1.msra.mxu0 %v58
    %101 = vmatprep.subr.mxu0 0.0
    %102 = vmatpush1.msra.mxu0 %v59
    %103 = vmatprep.subr.mxu0 0.0
    %104 = vmatpush1.msra.mxu0 %v60
    %105 = vmatprep.subr.mxu0 0.0
    %106 = vmatpush1.msra.mxu0 %v61
    %107 = vmatprep.subr.mxu0 0.0
    %108 = vmatpush1.msra.mxu0 %v62
    %109 = vmatprep.subr.mxu0 0.0
    %110 = vmatpush1.msra.mxu0 %v63
    %111 = vmatprep.subr.mxu0 0.0
    %112 = vmatpush1.msra.mxu0 %v64
    %113 = vmatprep.subr.mxu0 0.0
    %114 = vmatpush1.msra.mxu0 %v65
    %115 = vmatprep.subr.mxu0 0.0
    %116 = vmatpush1.msra.mxu0 %v66
    %117 = vmatprep.subr.mxu0 0.0
    %118 = vmatpush1.msra.mxu0 %v67
    %119 = vmatprep.subr.mxu0 0.0
    %120 = vmatpush1.msra.mxu0 %v68
    %121 = vmatprep.subr.mxu0 0.0
    %122 = vmatpush1.msra.mxu0 %v69
    %123 = vmatprep.subr.mxu0 0.0
    %124 = vmatpush1.msra.mxu0 %v70
    %125 = vmatprep.subr.mxu0 0.0
    %126 = vmatpush1.msra.mxu0 %v71
    %127 = vmatprep.subr.mxu0 0.0
    %128 = vmatpush1.msra.mxu0 %v72
    %129 = vmatprep.subr.mxu0 0.0
    %130 = vmatpush1.msra.mxu0 %v73
    %131 = vmatprep.subr.mxu0 0.0
    %132 = vmatpush1.msra.mxu0 %v74
    %133 = vmatprep.subr.mxu0 0.0
    %134 = vmatpush1.msra.mxu0 %v75
    %135 = vmatprep.subr.mxu0 0.0
    %136 = vmatpush1.msra.mxu0 %v76
    %137 = vmatprep.subr.mxu0 0.0
    %138 = vmatpush1.msra.mxu0 %v77
    %139 = vmatprep.subr.mxu0 0.0
    %140 = vmatpush1.msra.mxu0 %v78
    %141 = vmatprep.subr.mxu0 0.0
    %142 = vmatpush1.msra.mxu0 %v79
    %143 = vmatprep.subr.mxu0 0.0
    %144 = vmatpush1.msra.mxu0 %v80
    %145 = vmatprep.mubr.f32.mxu0 %v48
    %146 = vmatmul.mubr.f32.gmra.mrb[0].mxu0 %v47
    %v147 = vpop.f32.mrb[0].mxu0
    %v148 = vadd.f32 0.0, %v147
    %v149 = vpop.f32.mrb[0].mxu0
    %150 = vdwg.mxu0
    %v151 = vadd.f32 %v46, %v148
    %152 = vst [vmem:[#allocation2] sm:$0xff] %v151
    // Predicated region
    $region26: #{tpu_custom_call.1} parent=1 // pred_check
      %p153 = pneg %p41
    $region27: #{tpu_custom_call.1} parent=1 // pred_check_branch
      %155 = sbr.rel (%p153) target = $region29
    $region28: #{tpu_custom_call.1} parent=1 // pred_region
      %v156 = vld [vmem:[#allocation2] sm:$0xff]
      %v157 = vld [vmem:[%s2] sm:$0x1]
      %v159 = vlaneseq
      %v160 = vshrl.u32 %v159, 7
      %v161 = vsub.s32 0, %v160
      %v162 = vrot.slane %v157, %v161
      %v164 = vadd.f32 %v156, %v162
      %165 = vst [vmem:[#allocation8] sm:$0xff] %v164
    $region29: #{tpu_custom_call.1} parent=1 // pred_fallthru
      _
    // Predicated region
    $region30: #{tpu_custom_call.1} parent=1 // pred_check
      _
    $region31: #{tpu_custom_call.1} parent=1 // pred_check_branch
      %167 = sbr.rel (0) target = $region33
    $region32: #{tpu_custom_call.1} parent=1 // pred_region
      %s169 = ssub.s32 128, 128
      %170 = vsyncadd [#allocation5], %s169
      %s172 = sshll.u32 [#allocation8], 4
      %s173 = int_to_ptr.vmem [resolvable:$true] %s172
      %175 = dma.vmem_to_hbm [thread:$0]  %s173, 128, %s3, [#allocation5]
    $region33: #{tpu_custom_call.1} parent=1 // pred_fallthru
      _
    // Predicated region
    $region34: #{tpu_custom_call.1} parent=1 // pred_check
      _
    $region35: #{tpu_custom_call.1} parent=1 // pred_check_branch
      %177 = sbr.rel (0) target = $region37
    $region36: #{tpu_custom_call.1} parent=1 // pred_region
      %178 = dma.done [#allocation5], 128
    $region37: #{tpu_custom_call.1} parent=1 // pred_fallthru
      _
    %179 = vsyncpa [#allocation4], 1
    %180 = vsyncpa [#allocation7], 1
    %181 = vsyncpa [#allocation5], 1

</llo_original>
